<compile_context>
chip_gen: v7x
topology: tpu7x:2x2x1
jax: 0.10.0
libtpu: 0.0.40
codegen_flags: <defaults>
</compile_context>

<pallas_src>
import jax
import jax.numpy as jnp
from jax.experimental import pallas as pl
from jax.experimental.pallas import tpu as pltpu

_LANES = 128
_SUBLANES = 8
_MIN_KERNEL_ROWS = 32  # below this (< 4096 elems) the plain-jnp path is used


def _make_kernel(*, rows, tile_rows, shard_steps, masked, needs_edge_mask):
    """Sum-of-squared-(masked)-differences kernel.

    Grid = (num_shards, steps_per_shard).  Each shard accumulates its partial
    sum into its own (8, 128) output block, which is VMEM-resident across the
    inner 'arbitrary' (reduction) axis; the wrapper does the final reduce.
    All keyword args are static Python values baked in at trace time.
    """
    full_tiles = rows // tile_rows  # tiles with no invalid rows

    def kernel(*refs):
        if masked:
            pred_ref, gt_ref, mask_ref, o_ref = refs
        else:
            pred_ref, gt_ref, o_ref = refs

        c = pl.program_id(0)
        i = pl.program_id(1)

        @pl.when(i == 0)
        def _():
            o_ref[...] = jnp.zeros_like(o_ref)

        # Per-tile upcast (inputs may be bf16 / int8); accumulate in f32.
        d = pred_ref[...].astype(jnp.float32) - gt_ref[...].astype(jnp.float32)
        if masked:
            d = d * mask_ref[...].astype(jnp.float32)
        sq = d * d

        def fold(x):
            # (tile_rows,128) -> (tile_rows//8, 8, 128) splits the sublane dim
            # on vreg-tile boundaries; the axis-0 sum is plain vreg-wise VALU
            # adds (no XLU in the hot loop).
            return x.reshape(tile_rows // _SUBLANES, _SUBLANES, _LANES).sum(axis=0)

        if needs_edge_mask:
            tile_idx = c * shard_steps + i

            @pl.when(tile_idx < full_tiles)
            def _():
                o_ref[...] += fold(sq)

            @pl.when(tile_idx >= full_tiles)
            def _():
                # Ragged last tile / clamped redundant slots: zero rows that
                # fall outside the real array (their VMEM data is undefined).
                row = jax.lax.broadcasted_iota(jnp.int32, (tile_rows, _LANES), 0)
                valid = (row + tile_idx * tile_rows) < rows
                o_ref[...] += fold(jnp.where(valid, sq, 0.0))
        else:
            o_ref[...] += fold(sq)

    return kernel


def masked_mse_loss(pred, gt, mask=None, *, tile_rows=8192, num_cores=2):
    """Pallas equivalent of MaskedMseLoss.forward(pred, gt, mask)."""
    assert pred.shape == gt.shape, "pred/gt shape mismatch"
    n_elems = pred.size
    assert n_elems > 0, "empty input"
    assert num_cores >= 1

    masked = mask is not None
    if masked and mask.shape != pred.shape:
        # TODO(synk): for broadcastable masks, reuse the mask block via the
        # index_map (broadcast axis as a grid axis) instead of materializing
        # the broadcast in HBM.
        mask = jnp.broadcast_to(mask, pred.shape)

    pred_f = pred.reshape(-1)
    gt_f = gt.reshape(-1)
    mask_f = None
    if masked:
        mask_f = mask.reshape(-1)
        if mask_f.dtype == jnp.bool_:
            # 1-byte int8 stream; f32 upcast happens per-tile in-kernel.
            mask_f = mask_f.astype(jnp.int8)

    def _jnp_sum_sq(p, g, m):
        d = p.astype(jnp.float32) - g.astype(jnp.float32)
        if m is not None:
            d = d * m.astype(jnp.float32)
        return jnp.sum(d * d)

    rows = n_elems // _LANES
    tail = n_elems - rows * _LANES

    if rows < _MIN_KERNEL_ROWS:
        # Tiny input: fixed kernel overhead dominates; keep it in plain jnp.
        return _jnp_sum_sq(pred_f, gt_f, mask_f) / jnp.float32(n_elems)

    # Kernel handles the 128-aligned prefix; the <=127-element tail is folded
    # in with plain jnp below (no full-array jnp.pad copy).
    def _prefix2d(x):
        if tail:
            x = x[: rows * _LANES]
        return x.reshape(rows, _LANES)

    inputs2d = [_prefix2d(pred_f), _prefix2d(gt_f)]
    if masked:
        inputs2d.append(_prefix2d(mask_f))

    # Row tile: multiple of 32 (covers f32/bf16/int8 min sublane tiles) unless
    # the whole prefix fits in a single full-dim tile.
    tr_req = max(32, (int(tile_rows) // 32) * 32)
    if rows <= tr_req and rows % _SUBLANES == 0:
        tr = rows
    else:
        tr = min(tr_req, (rows // 32) * 32)

    total_tiles = -(-rows // tr)
    shards = num_cores if total_tiles >= num_cores else 1
    shard_steps = -(-total_tiles // shards)
    total_slots = shards * shard_steps
    needs_edge_mask = (total_slots * tr) != rows

    def in_map(c, i):
        t = c * shard_steps + i
        if total_slots > total_tiles:
            # Redundant trailing slots re-read the last real tile (keeps the
            # DMA in bounds); their contribution is zeroed in-kernel.
            t = jnp.minimum(t, total_tiles - 1)
        return (t, 0)

    kernel = _make_kernel(rows=rows, tile_rows=tr, shard_steps=shard_steps,
                          masked=masked, needs_edge_mask=needs_edge_mask)

    # VMEM budget: double-buffered input blocks (+ tiny per-shard output).
    block_bytes = sum(2 * tr * _LANES * x.dtype.itemsize for x in inputs2d)
    vmem_limit = int(min(64 << 20, max(32 << 20, block_bytes + (4 << 20))))

    partials = pl.pallas_call(
        kernel,
        out_shape=jax.ShapeDtypeStruct((shards * _SUBLANES, _LANES), jnp.float32),
        grid_spec=pltpu.PrefetchScalarGridSpec(
            num_scalar_prefetch=0,
            grid=(shards, shard_steps),
            in_specs=[pl.BlockSpec((tr, _LANES), in_map) for _ in inputs2d],
            out_specs=pl.BlockSpec((_SUBLANES, _LANES), lambda c, i: (c, 0)),
        ),
        compiler_params=pltpu.CompilerParams(
            # Shard axis is parallel (both v7x TensorCores stream half the
            # rows each); the inner axis is the serial reduction.
            dimension_semantics=("parallel", "arbitrary"),
            vmem_limit_bytes=vmem_limit,
        ),
    )(*inputs2d)

    total = jnp.sum(partials)
    if tail:
        total = total + _jnp_sum_sq(
            pred_f[rows * _LANES:], gt_f[rows * _LANES:],
            mask_f[rows * _LANES:] if masked else None)
    return total / jnp.float32(n_elems)


if __name__ == "__main__":
    key = jax.random.PRNGKey(0)
    k = jax.random.split(key, 12)

    # 1) f32 pred/gt + f32 mask (NCHW-like), single-tile kernel path.
    shape = (2, 4, 64, 64)  # 32768 elements -> 256 rows
    pred = jax.random.normal(k[0], shape, dtype=jnp.float32)
    gt = jax.random.normal(k[1], shape, dtype=jnp.float32)
    mask = (jax.random.uniform(k[2], shape) > 0.5).astype(jnp.float32)
    out_m = masked_mse_loss(pred, gt, mask)
    out_p = masked_mse_loss(pred, gt, None)
    jax.block_until_ready((out_m, out_p))
    ref_m = jnp.mean(((pred * mask) - (gt * mask)) ** 2)
    ref_p = jnp.mean((pred - gt) ** 2)
    assert jnp.allclose(out_m, ref_m, rtol=1e-5, atol=1e-6)
    assert jnp.allclose(out_p, ref_p, rtol=1e-5, atol=1e-6)

    # 2) Native bf16 pred/gt + int8 mask, multi-tile + two-shard grid.
    shape2 = (4, 8, 64, 96)  # 196608 elements -> 1536 rows
    pred2 = jax.random.normal(k[3], shape2, dtype=jnp.bfloat16)
    gt2 = jax.random.normal(k[4], shape2, dtype=jnp.bfloat16)
    mask2 = (jax.random.uniform(k[5], shape2) > 0.5).astype(jnp.int8)
    out2 = masked_mse_loss(pred2, gt2, mask2, tile_rows=256)
    jax.block_until_ready(out2)
    ref2 = jnp.mean(((pred2.astype(jnp.float32) - gt2.astype(jnp.float32))
                     * mask2.astype(jnp.float32)) ** 2)
    assert jnp.allclose(out2, ref2, rtol=1e-4, atol=1e-6)

    # 3) Ragged element count: partial last tile + clamped redundant shard
    #    slot + bool mask (wrapper -> int8) + jnp tail path.
    n3 = 150 * 128 + 17  # rows=150 (not a multiple of 32), 17-element tail
    pred3 = jax.random.normal(k[6], (n3,), dtype=jnp.float32)
    gt3 = jax.random.normal(k[7], (n3,), dtype=jnp.float32)
    mask3 = jax.random.uniform(k[8], (n3,)) > 0.5
    out3_m = masked_mse_loss(pred3, gt3, mask3, tile_rows=32)
    out3_p = masked_mse_loss(pred3, gt3, None, tile_rows=32)
    jax.block_until_ready((out3_m, out3_p))
    ref3_m = jnp.mean(((pred3 - gt3) * mask3.astype(jnp.float32)) ** 2)
    ref3_p = jnp.mean((pred3 - gt3) ** 2)
    assert jnp.allclose(out3_m, ref3_m, rtol=1e-5, atol=1e-6)
    assert jnp.allclose(out3_p, ref3_p, rtol=1e-5, atol=1e-6)

    # 4) Tiny input -> plain-jnp fallback path.
    shape4 = (2, 4, 8, 8)  # 512 elements
    pred4 = jax.random.normal(k[9], shape4, dtype=jnp.float32)
    gt4 = jax.random.normal(k[10], shape4, dtype=jnp.float32)
    out4 = masked_mse_loss(pred4, gt4, None)
    jax.block_until_ready(out4)
    assert jnp.allclose(out4, jnp.mean((pred4 - gt4) ** 2), rtol=1e-5, atol=1e-6)

    print("KERNEL_OK")
</pallas_src>

<mosaic_0001>
module attributes {stable_mosaic.version = 11 : i64} {
  func.func @kernel(%arg0: i32, %arg1: i32, %arg2: memref<256x128xf32, #tpu.memory_space<vmem>>, %arg3: memref<256x128xf32, #tpu.memory_space<vmem>>, %arg4: memref<256x128xf32, #tpu.memory_space<vmem>>, %arg5: memref<8x128xf32, #tpu.memory_space<vmem>>) attributes {dimension_semantics = [#tpu.dimension_semantics<parallel>, #tpu.dimension_semantics<arbitrary>], iteration_bounds = array<i64: 1, 1>, scalar_prefetch = 0 : i64, scratch_operands = 0 : i64, tpu.core_type = #tpu.core_type<tc>, window_params = [{transform_indices = @transform_0, window_bounds = array<i64: 256, 128>}, {transform_indices = @transform_1, window_bounds = array<i64: 256, 128>}, {transform_indices = @transform_2, window_bounds = array<i64: 256, 128>}, {transform_indices = @transform_3, window_bounds = array<i64: 8, 128>}]} {
    %c0_i32 = arith.constant 0 : i32
    %0 = arith.cmpi eq, %arg1, %c0_i32 : i32
    %1 = arith.extui %0 : i1 to i32
    %c0_i32_0 = arith.constant 0 : i32
    %2 = arith.cmpi ne, %1, %c0_i32_0 : i32
    scf.if %2 {
      %cst_10 = arith.constant 0.000000e+00 : f32
      %14 = vector.broadcast %cst_10 : f32 to vector<8x128xf32>
      %c0_11 = arith.constant 0 : index
      %c0_12 = arith.constant 0 : index
      %15 = vector.load %arg5[%c0_11, %c0_12] : memref<8x128xf32, #tpu.memory_space<vmem>>, vector<8x128xf32>
      tpu.vector_store %arg5[%c0_11, %c0_12], %14 {strides = array<i32>} : memref<8x128xf32, #tpu.memory_space<vmem>>, vector<8x128xf32>,
    } else {
    }
    %c0 = arith.constant 0 : index
    %c0_1 = arith.constant 0 : index
    %3 = vector.load %arg2[%c0, %c0_1] : memref<256x128xf32, #tpu.memory_space<vmem>>, vector<256x128xf32>
    %c0_2 = arith.constant 0 : index
    %c0_3 = arith.constant 0 : index
    %4 = vector.load %arg3[%c0_2, %c0_3] : memref<256x128xf32, #tpu.memory_space<vmem>>, vector<256x128xf32>
    %5 = arith.subf %3, %4 : vector<256x128xf32>
    %c0_4 = arith.constant 0 : index
    %c0_5 = arith.constant 0 : index
    %6 = vector.load %arg4[%c0_4, %c0_5] : memref<256x128xf32, #tpu.memory_space<vmem>>, vector<256x128xf32>
    %7 = arith.mulf %5, %6 : vector<256x128xf32>
    %8 = arith.mulf %7, %7 : vector<256x128xf32>
    %c0_6 = arith.constant 0 : index
    %c0_7 = arith.constant 0 : index
    %9 = vector.load %arg5[%c0_6, %c0_7] : memref<8x128xf32, #tpu.memory_space<vmem>>, vector<8x128xf32>
    %10 = vector.shape_cast %8 : vector<256x128xf32> to vector<32x8x128xf32>
    %cst = arith.constant dense<0.000000e+00> : vector<8x128xf32>
    %11 = vector.multi_reduction <add>, %10, %cst [0] : vector<32x8x128xf32> to vector<8x128xf32>
    %12 = arith.addf %9, %11 : vector<8x128xf32>
    %c0_8 = arith.constant 0 : index
    %c0_9 = arith.constant 0 : index
    %13 = vector.load %arg5[%c0_8, %c0_9] : memref<8x128xf32, #tpu.memory_space<vmem>>, vector<8x128xf32>
    tpu.vector_store %arg5[%c0_8, %c0_9], %12 {strides = array<i32>} : memref<8x128xf32, #tpu.memory_space<vmem>>, vector<8x128xf32>,
    return
  }
  func.func @transform_0(%arg0: i32, %arg1: i32) -> (i32, i32) {
    %c1_i32 = arith.constant 1 : i32
    %0 = arith.muli %arg0, %c1_i32 : i32
    %1 = arith.addi %0, %arg1 : i32
    %c0_i32 = arith.constant 0 : i32
    %c0_i32_0 = arith.constant 0 : i32
    return %1, %c0_i32 : i32, i32
  }
  func.func @transform_1(%arg0: i32, %arg1: i32) -> (i32, i32) {
    %c1_i32 = arith.constant 1 : i32
    %0 = arith.muli %arg0, %c1_i32 : i32
    %1 = arith.addi %0, %arg1 : i32
    %c0_i32 = arith.constant 0 : i32
    %c0_i32_0 = arith.constant 0 : i32
    return %1, %c0_i32 : i32, i32
  }
  func.func @transform_2(%arg0: i32, %arg1: i32) -> (i32, i32) {
    %c1_i32 = arith.constant 1 : i32
    %0 = arith.muli %arg0, %c1_i32 : i32
    %1 = arith.addi %0, %arg1 : i32
    %c0_i32 = arith.constant 0 : i32
    %c0_i32_0 = arith.constant 0 : i32
    return %1, %c0_i32 : i32, i32
  }
  func.func @transform_3(%arg0: i32, %arg1: i32) -> (i32, i32) {
    %c0_i32 = arith.constant 0 : i32
    %c0_i32_0 = arith.constant 0 : i32
    return %arg0, %c0_i32 : i32, i32
  }
}

</mosaic_0001>

<llo_original>
// kernel: tpu_custom_call.1
$region0: #{tpu_custom_call.1}
  #allocation0 [shape = 'u32[]', space=smem, size = 0x4, offset = 0x4, fixed_abs, tag = 'smem constant byte address 0x4 - core index']
  #allocation1 [shape = 'u32[144,128]{1,0:T(1,128)}', space=vmem, size = 0x12000, scoped, tag = 'internal scratch']
  %s0 = inlined_call_operand.hbm [shape: f32[256,128], index: 0, kind: input, shape index: {}]
  %s1 = inlined_call_operand.hbm [shape: f32[256,128], index: 1, kind: input, shape index: {}]
  %s2 = inlined_call_operand.hbm [shape: f32[256,128], index: 2, kind: input, shape index: {}]
  %s3 = inlined_call_operand.hbm [shape: f32[8,128], index: 3, kind: output, shape index: {}]
  %s4 = sld [smem:[#allocation0]]
  $region38: #{tpu_custom_call.1} parent=0
    _
  %s6 = ssub.s32 1, %s4
  %s7 = scalar_select 0, %s6, %s4
  $region1: #{tpu_custom_call.1} parent=0
    #allocation2 [shape = 'u8[131072]{0}', space=vmem, size = 0x20000, scoped, tag = 'input window, operand 0, single buffered']
    #allocation3 [shape = 's32[1]{0}', space=sflag, size = 0x4, scoped, tag = 'scoped memory for tpu_custom_call.1']
    #allocation4 [shape = 's32[1]{0}', space=sflag, size = 0x4, scoped, tag = 'scoped memory for tpu_custom_call.1']
    #allocation5 [shape = 'u8[131072]{0}', space=vmem, size = 0x20000, scoped, tag = 'input window, operand 1, single buffered']
    #allocation6 [shape = 's32[1]{0}', space=sflag, size = 0x4, scoped, tag = 'scoped memory for tpu_custom_call.1']
    #allocation7 [shape = 'u8[131072]{0}', space=vmem, size = 0x20000, scoped, tag = 'input window, operand 2, single buffered']
    #allocation8 [shape = 'u8[4096]{0}', space=vmem, size = 0x1000, scoped, tag = 'output window, operand 0, single buffered']
    %8 = vsyncpa [#allocation3], 0
    %9 = vsyncpa [#allocation6], 0
    %10 = vsyncpa [#allocation4], 0
    // Predicated region
    $region2: #{tpu_custom_call.1} parent=1 // pred_check
      _
    $region3: #{tpu_custom_call.1} parent=1 // pred_check_branch
      %12 = sbr.rel (0) target = $region5
    $region4: #{tpu_custom_call.1} parent=1 // pred_region
      %s13 = sadd.s32 0, 0
      %s14 = smul.u32 32, %s13
      %s16 = ssub.s32 4096, 4096
      %17 = vsyncadd [#allocation3], %s16
      %s18 = smul.addr %s14, 128
      %s19 = scalar_lea.hbm %s0, %s18
      %s20 = sshll.u32 [#allocation2], 4
      %s21 = int_to_ptr.vmem [resolvable:$true] %s20
      %26 = dma.hbm_to_vmem [thread:$0]  %s19, 4096, %s21, [#allocation3], 128, 128, 8
    $region5: #{tpu_custom_call.1} parent=1 // pred_fallthru
      _
    // Predicated region
    $region6: #{tpu_custom_call.1} parent=1 // pred_check
      _
    $region7: #{tpu_custom_call.1} parent=1 // pred_check_branch
      %28 = sbr.rel (0) target = $region9
    $region8: #{tpu_custom_call.1} parent=1 // pred_region
      %s29 = sadd.s32 0, 0
      %s30 = smul.u32 32, %s29
      %s32 = ssub.s32 4096, 4096
      %33 = vsyncadd [#allocation6], %s32
      %s34 = smul.addr %s30, 128
      %s35 = scalar_lea.hbm %s1, %s34
      %s36 = sshll.u32 [#allocation5], 4
      %s37 = int_to_ptr.vmem [resolvable:$true] %s36
      %42 = dma.hbm_to_vmem [thread:$0]  %s35, 4096, %s37, [#allocation6], 128, 128, 8
    $region9: #{tpu_custom_call.1} parent=1 // pred_fallthru
      _
    // Predicated region
    $region10: #{tpu_custom_call.1} parent=1 // pred_check
      _
    $region11: #{tpu_custom_call.1} parent=1 // pred_check_branch
      %44 = sbr.rel (0) target = $region13
    $region12: #{tpu_custom_call.1} parent=1 // pred_region
      %s45 = sadd.s32 0, 0
      %s46 = smul.u32 32, %s45
      %s48 = ssub.s32 4096, 4096
      %49 = vsyncadd [#allocation6], %s48
      %s50 = smul.addr %s46, 128
      %s51 = scalar_lea.hbm %s2, %s50
      %s52 = sshll.u32 [#allocation7], 4
      %s53 = int_to_ptr.vmem [resolvable:$true] %s52
      %58 = dma.hbm_to_vmem [thread:$0]  %s51, 4096, %s53, [#allocation6], 128, 128, 8
    $region13: #{tpu_custom_call.1} parent=1 // pred_fallthru
      _
    // Predicated region
    $region14: #{tpu_custom_call.1} parent=1 // pred_check
      _
    $region15: #{tpu_custom_call.1} parent=1 // pred_check_branch
      %60 = sbr.rel (0) target = $region17
    $region16: #{tpu_custom_call.1} parent=1 // pred_region
      %61 = dma.done [#allocation3], 4096
    $region17: #{tpu_custom_call.1} parent=1 // pred_fallthru
      _
    // Predicated region
    $region18: #{tpu_custom_call.1} parent=1 // pred_check
      _
    $region19: #{tpu_custom_call.1} parent=1 // pred_check_branch
      %63 = sbr.rel (0) target = $region21
    $region20: #{tpu_custom_call.1} parent=1 // pred_region
      %64 = dma.done [#allocation6], 4096
    $region21: #{tpu_custom_call.1} parent=1 // pred_fallthru
      _
    // Predicated region
    $region22: #{tpu_custom_call.1} parent=1 // pred_check
      _
    $region23: #{tpu_custom_call.1} parent=1 // pred_check_branch
      %66 = sbr.rel (0) target = $region25
    $region24: #{tpu_custom_call.1} parent=1 // pred_region
      %67 = dma.done [#allocation6], 4096
    $region25: #{tpu_custom_call.1} parent=1 // pred_fallthru
      _
    %s68 = sadd.s32 0, 0
    %s69 = smul.u32 32, %s68
    %s70 = sadd.s32 0, 0
    %s71 = smul.u32 32, %s70
    %s72 = sadd.s32 0, 0
    %s73 = smul.u32 32, %s72
    %p74 = scmp.eq.s32.totalorder 0, 0
    // Predicated region
    $region26: #{tpu_custom_call.1} parent=1 // pred_check
      %p75 = pneg %p74
    $region27: #{tpu_custom_call.1} parent=1 // pred_check_branch
      %77 = sbr.rel (%p75) target = $region29
    $region28: #{tpu_custom_call.1} parent=1 // pred_region
      %78 = vst [vmem:[#allocation8] sm:$0xff] 0.0
    $region29: #{tpu_custom_call.1} parent=1 // pred_fallthru
      _
    %v79 = vld [vmem:[#allocation2] sm:$0xff]
    %v80 = vld [vmem:[#allocation2 + $0x8] sm:$0xff]
    %v81 = vld [vmem:[#allocation2 + $0x10] sm:$0xff]
    %v82 = vld [vmem:[#allocation2 + $0x18] sm:$0xff]
    %v83 = vld [vmem:[#allocation2 + $0x20] sm:$0xff]
    %v84 = vld [vmem:[#allocation2 + $0x28] sm:$0xff]
    %v85 = vld [vmem:[#allocation2 + $0x30] sm:$0xff]
    %v86 = vld [vmem:[#allocation2 + $0x38] sm:$0xff]
    %v87 = vld [vmem:[#allocation2 + $0x40] sm:$0xff]
    %v88 = vld [vmem:[#allocation2 + $0x48] sm:$0xff]
    %v89 = vld [vmem:[#allocation2 + $0x50] sm:$0xff]
    %v90 = vld [vmem:[#allocation2 + $0x58] sm:$0xff]
    %v91 = vld [vmem:[#allocation2 + $0x60] sm:$0xff]
    %v92 = vld [vmem:[#allocation2 + $0x68] sm:$0xff]
    %v93 = vld [vmem:[#allocation2 + $0x70] sm:$0xff]
    %v94 = vld [vmem:[#allocation2 + $0x78] sm:$0xff]
    %v95 = vld [vmem:[#allocation2 + $0x80] sm:$0xff]
    %v96 = vld [vmem:[#allocation2 + $0x88] sm:$0xff]
    %v97 = vld [vmem:[#allocation2 + $0x90] sm:$0xff]
    %v98 = vld [vmem:[#allocation2 + $0x98] sm:$0xff]
    %v99 = vld [vmem:[#allocation2 + $0xa0] sm:$0xff]
    %v100 = vld [vmem:[#allocation2 + $0xa8] sm:$0xff]
    %v101 = vld [vmem:[#allocation2 + $0xb0] sm:$0xff]
    %v102 = vld [vmem:[#allocation2 + $0xb8] sm:$0xff]
    %v103 = vld [vmem:[#allocation2 + $0xc0] sm:$0xff]
    %v104 = vld [vmem:[#allocation2 + $0xc8] sm:$0xff]
    %v105 = vld [vmem:[#allocation2 + $0xd0] sm:$0xff]
    %v106 = vld [vmem:[#allocation2 + $0xd8] sm:$0xff]
    %v107 = vld [vmem:[#allocation2 + $0xe0] sm:$0xff]
    %v108 = vld [vmem:[#allocation2 + $0xe8] sm:$0xff]
    %v109 = vld [vmem:[#allocation2 + $0xf0] sm:$0xff]
    %v110 = vld [vmem:[#allocation2 + $0xf8] sm:$0xff]
    %v111 = vld [vmem:[#allocation5] sm:$0xff]
    %v112 = vld [vmem:[#allocation5 + $0x8] sm:$0xff]
    %v113 = vld [vmem:[#allocation5 + $0x10] sm:$0xff]
    %v114 = vld [vmem:[#allocation5 + $0x18] sm:$0xff]
    %v115 = vld [vmem:[#allocation5 + $0x20] sm:$0xff]
    %v116 = vld [vmem:[#allocation5 + $0x28] sm:$0xff]
    %v117 = vld [vmem:[#allocation5 + $0x30] sm:$0xff]
    %v118 = vld [vmem:[#allocation5 + $0x38] sm:$0xff]
    %v119 = vld [vmem:[#allocation5 + $0x40] sm:$0xff]
    %v120 = vld [vmem:[#allocation5 + $0x48] sm:$0xff]
    %v121 = vld [vmem:[#allocation5 + $0x50] sm:$0xff]
    %v122 = vld [vmem:[#allocation5 + $0x58] sm:$0xff]
    %v123 = vld [vmem:[#allocation5 + $0x60] sm:$0xff]
    %v124 = vld [vmem:[#allocation5 + $0x68] sm:$0xff]
    %v125 = vld [vmem:[#allocation5 + $0x70] sm:$0xff]
    %v126 = vld [vmem:[#allocation5 + $0x78] sm:$0xff]
    %v127 = vld [vmem:[#allocation5 + $0x80] sm:$0xff]
    %v128 = vld [vmem:[#allocation5 + $0x88] sm:$0xff]
    %v129 = vld [vmem:[#allocation5 + $0x90] sm:$0xff]
    %v130 = vld [vmem:[#allocation5 + $0x98] sm:$0xff]
    %v131 = vld [vmem:[#allocation5 + $0xa0] sm:$0xff]
    %v132 = vld [vmem:[#allocation5 + $0xa8] sm:$0xff]
    %v133 = vld [vmem:[#allocation5 + $0xb0] sm:$0xff]
    %v134 = vld [vmem:[#allocation5 + $0xb8] sm:$0xff]
    %v135 = vld [vmem:[#allocation5 + $0xc0] sm:$0xff]
    %v136 = vld [vmem:[#allocation5 + $0xc8] sm:$0xff]
    %v137 = vld [vmem:[#allocation5 + $0xd0] sm:$0xff]
    %v138 = vld [vmem:[#allocation5 + $0xd8] sm:$0xff]
    %v139 = vld [vmem:[#allocation5 + $0xe0] sm:$0xff]
    %v140 = vld [vmem:[#allocation5 + $0xe8] sm:$0xff]
    %v141 = vld [vmem:[#allocation5 + $0xf0] sm:$0xff]
    %v142 = vld [vmem:[#allocation5 + $0xf8] sm:$0xff]
    %v143 = vsub.f32 %v79, %v111
    %v144 = vsub.f32 %v80, %v112
    %v145 = vsub.f32 %v81, %v113
    %v146 = vsub.f32 %v82, %v114
    %v147 = vsub.f32 %v83, %v115
    %v148 = vsub.f32 %v84, %v116
    %v149 = vsub.f32 %v85, %v117
    %v150 = vsub.f32 %v86, %v118
    %v151 = vsub.f32 %v87, %v119
    %v152 = vsub.f32 %v88, %v120
    %v153 = vsub.f32 %v89, %v121
    %v154 = vsub.f32 %v90, %v122
    %v155 = vsub.f32 %v91, %v123
    %v156 = vsub.f32 %v92, %v124
    %v157 = vsub.f32 %v93, %v125
    %v158 = vsub.f32 %v94, %v126
    %v159 = vsub.f32 %v95, %v127
    %v160 = vsub.f32 %v96, %v128
    %v161 = vsub.f32 %v97, %v129
    %v162 = vsub.f32 %v98, %v130
    %v163 = vsub.f32 %v99, %v131
    %v164 = vsub.f32 %v100, %v132
    %v165 = vsub.f32 %v101, %v133
    %v166 = vsub.f32 %v102, %v134
    %v167 = vsub.f32 %v103, %v135
    %v168 = vsub.f32 %v104, %v136
    %v169 = vsub.f32 %v105, %v137
    %v170 = vsub.f32 %v106, %v138
    %v171 = vsub.f32 %v107, %v139
    %v172 = vsub.f32 %v108, %v140
    %v173 = vsub.f32 %v109, %v141
    %v174 = vsub.f32 %v110, %v142
    %v175 = vld [vmem:[#allocation7] sm:$0xff]
    %v176 = vld [vmem:[#allocation7 + $0x8] sm:$0xff]
    %v177 = vld [vmem:[#allocation7 + $0x10] sm:$0xff]
    %v178 = vld [vmem:[#allocation7 + $0x18] sm:$0xff]
    %v179 = vld [vmem:[#allocation7 + $0x20] sm:$0xff]
    %v180 = vld [vmem:[#allocation7 + $0x28] sm:$0xff]
    %v181 = vld [vmem:[#allocation7 + $0x30] sm:$0xff]
    %v182 = vld [vmem:[#allocation7 + $0x38] sm:$0xff]
    %v183 = vld [vmem:[#allocation7 + $0x40] sm:$0xff]
    %v184 = vld [vmem:[#allocation7 + $0x48] sm:$0xff]
    %v185 = vld [vmem:[#allocation7 + $0x50] sm:$0xff]
    %v186 = vld [vmem:[#allocation7 + $0x58] sm:$0xff]
    %v187 = vld [vmem:[#allocation7 + $0x60] sm:$0xff]
    %v188 = vld [vmem:[#allocation7 + $0x68] sm:$0xff]
    %v189 = vld [vmem:[#allocation7 + $0x70] sm:$0xff]
    %v190 = vld [vmem:[#allocation7 + $0x78] sm:$0xff]
    %v191 = vld [vmem:[#allocation7 + $0x80] sm:$0xff]
    %v192 = vld [vmem:[#allocation7 + $0x88] sm:$0xff]
    %v193 = vld [vmem:[#allocation7 + $0x90] sm:$0xff]
    %v194 = vld [vmem:[#allocation7 + $0x98] sm:$0xff]
    %v195 = vld [vmem:[#allocation7 + $0xa0] sm:$0xff]
    %v196 = vld [vmem:[#allocation7 + $0xa8] sm:$0xff]
    %v197 = vld [vmem:[#allocation7 + $0xb0] sm:$0xff]
    %v198 = vld [vmem:[#allocation7 + $0xb8] sm:$0xff]
    %v199 = vld [vmem:[#allocation7 + $0xc0] sm:$0xff]
    %v200 = vld [vmem:[#allocation7 + $0xc8] sm:$0xff]
    %v201 = vld [vmem:[#allocation7 + $0xd0] sm:$0xff]
    %v202 = vld [vmem:[#allocation7 + $0xd8] sm:$0xff]
    %v203 = vld [vmem:[#allocation7 + $0xe0] sm:$0xff]
    %v204 = vld [vmem:[#allocation7 + $0xe8] sm:$0xff]
    %v205 = vld [vmem:[#allocation7 + $0xf0] sm:$0xff]
    %v206 = vld [vmem:[#allocation7 + $0xf8] sm:$0xff]
    %v207 = vmul.f32 %v143, %v175
    %v208 = vmul.f32 %v144, %v176
    %v209 = vmul.f32 %v145, %v177
    %v210 = vmul.f32 %v146, %v178
    %v211 = vmul.f32 %v147, %v179
    %v212 = vmul.f32 %v148, %v180
    %v213 = vmul.f32 %v149, %v181
    %v214 = vmul.f32 %v150, %v182
    %v215 = vmul.f32 %v151, %v183
    %v216 = vmul.f32 %v152, %v184
    %v217 = vmul.f32 %v153, %v185
    %v218 = vmul.f32 %v154, %v186
    %v219 = vmul.f32 %v155, %v187
    %v220 = vmul.f32 %v156, %v188
    %v221 = vmul.f32 %v157, %v189
    %v222 = vmul.f32 %v158, %v190
    %v223 = vmul.f32 %v159, %v191
    %v224 = vmul.f32 %v160, %v192
    %v225 = vmul.f32 %v161, %v193
    %v226 = vmul.f32 %v162, %v194
    %v227 = vmul.f32 %v163, %v195
    %v228 = vmul.f32 %v164, %v196
    %v229 = vmul.f32 %v165, %v197
    %v230 = vmul.f32 %v166, %v198
    %v231 = vmul.f32 %v167, %v199
    %v232 = vmul.f32 %v168, %v200
    %v233 = vmul.f32 %v169, %v201
    %v234 = vmul.f32 %v170, %v202
    %v235 = vmul.f32 %v171, %v203
    %v236 = vmul.f32 %v172, %v204
    %v237 = vmul.f32 %v173, %v205
    %v238 = vmul.f32 %v174, %v206
    %v239 = vmul.f32 %v207, %v207
    %v240 = vmul.f32 %v208, %v208
    %v241 = vmul.f32 %v209, %v209
    %v242 = vmul.f32 %v210, %v210
    %v243 = vmul.f32 %v211, %v211
    %v244 = vmul.f32 %v212, %v212
    %v245 = vmul.f32 %v213, %v213
    %v246 = vmul.f32 %v214, %v214
    %v247 = vmul.f32 %v215, %v215
    %v248 = vmul.f32 %v216, %v216
    %v249 = vmul.f32 %v217, %v217
    %v250 = vmul.f32 %v218, %v218
    %v251 = vmul.f32 %v219, %v219
    %v252 = vmul.f32 %v220, %v220
    %v253 = vmul.f32 %v221, %v221
    %v254 = vmul.f32 %v222, %v222
    %v255 = vmul.f32 %v223, %v223
    %v256 = vmul.f32 %v224, %v224
    %v257 = vmul.f32 %v225, %v225
    %v258 = vmul.f32 %v226, %v226
    %v259 = vmul.f32 %v227, %v227
    %v260 = vmul.f32 %v228, %v228
    %v261 = vmul.f32 %v229, %v229
    %v262 = vmul.f32 %v230, %v230
    %v263 = vmul.f32 %v231, %v231
    %v264 = vmul.f32 %v232, %v232
    %v265 = vmul.f32 %v233, %v233
    %v266 = vmul.f32 %v234, %v234
    %v267 = vmul.f32 %v235, %v235
    %v268 = vmul.f32 %v236, %v236
    %v269 = vmul.f32 %v237, %v237
    %v270 = vmul.f32 %v238, %v238
    %v271 = vld [vmem:[#allocation8] sm:$0xff]
    %v272 = vadd.f32 %v239, %v240
    %v273 = vadd.f32 %v272, %v241
    %v274 = vadd.f32 %v273, %v242
    %v275 = vadd.f32 %v274, %v243
    %v276 = vadd.f32 %v275, %v244
    %v277 = vadd.f32 %v276, %v245
    %v278 = vadd.f32 %v277, %v246
    %v279 = vadd.f32 %v278, %v247
    %v280 = vadd.f32 %v279, %v248
    %v281 = vadd.f32 %v280, %v249
    %v282 = vadd.f32 %v281, %v250
    %v283 = vadd.f32 %v282, %v251
    %v284 = vadd.f32 %v283, %v252
    %v285 = vadd.f32 %v284, %v253
    %v286 = vadd.f32 %v285, %v254
    %v287 = vadd.f32 %v286, %v255
    %v288 = vadd.f32 %v287, %v256
    %v289 = vadd.f32 %v288, %v257
    %v290 = vadd.f32 %v289, %v258
    %v291 = vadd.f32 %v290, %v259
    %v292 = vadd.f32 %v291, %v260
    %v293 = vadd.f32 %v292, %v261
    %v294 = vadd.f32 %v293, %v262
    %v295 = vadd.f32 %v294, %v263
    %v296 = vadd.f32 %v295, %v264
    %v297 = vadd.f32 %v296, %v265
    %v298 = vadd.f32 %v297, %v266
    %v299 = vadd.f32 %v298, %v267
    %v300 = vadd.f32 %v299, %v268
    %v301 = vadd.f32 %v300, %v269
    %v302 = vadd.f32 %v301, %v270
    %v303 = vadd.f32 %v271, %v302
    %304 = vst [vmem:[#allocation8] sm:$0xff] %v303
    // Predicated region
    $region30: #{tpu_custom_call.1} parent=1 // pred_check
      _
    $region31: #{tpu_custom_call.1} parent=1 // pred_check_branch
      %306 = sbr.rel (0) target = $region33
    $region32: #{tpu_custom_call.1} parent=1 // pred_region
      %s308 = ssub.s32 128, 128
      %309 = vsyncadd [#allocation4], %s308
      %s311 = sshll.u32 [#allocation8], 4
      %s312 = int_to_ptr.vmem [resolvable:$true] %s311
      %314 = dma.vmem_to_hbm [thread:$0]  %s312, 128, %s3, [#allocation4]
    $region33: #{tpu_custom_call.1} parent=1 // pred_fallthru
      _
    // Predicated region
    $region34: #{tpu_custom_call.1} parent=1 // pred_check
      _
    $region35: #{tpu_custom_call.1} parent=1 // pred_check_branch
      %316 = sbr.rel (0) target = $region37
    $region36: #{tpu_custom_call.1} parent=1 // pred_region
      %317 = dma.done [#allocation4], 128
    $region37: #{tpu_custom_call.1} parent=1 // pred_fallthru
      _
    %318 = vsyncpa [#allocation3], 1
    %319 = vsyncpa [#allocation6], 1
    %320 = vsyncpa [#allocation4], 1

</llo_original>
